<compile_context>
chip_gen: v6e
topology: v6e:2x2x1
jax: 0.10.0
libtpu: 0.0.40
codegen_flags: <defaults>
</compile_context>

<pallas_src>
import functools

import jax
import jax.numpy as jnp
from jax.experimental import pallas as pl
from jax.experimental.pallas import tpu as pltpu


OUT_COLS = 8    # fc4's 2 outputs padded to 8 lanes (masked store in-kernel,
VALID_OUT = 2   # but only 32 B/row of HBM writeback); wrapper slices [:, :2].


def _round_up(n, m):
    return ((n + m - 1) // m) * m


def _silu(h):
    # SiLU = h * sigmoid(h).  exp() goes to the EUP; the approx reciprocal
    # moves the divide to the EUP slot as well (free vs. VALU).  exp(-h)
    # overflowing to inf for strongly negative h still resolves to 0, no NaN.
    return h * pl.reciprocal(1.0 + jnp.exp(-h), approx=True)


def mouse_net_kernel(x_ref,
                     w1_ref, b1_ref,
                     w2_ref, b2_ref,
                     w3_ref, b3_ref,
                     w4_ref, b4_ref,
                     o_ref):
    """One batch tile: (TB, 10) -> (TB, OUT_COLS). BN/bias folded into W/b."""
    mm = w1_ref.dtype  # bf16 by default; f32 if requested via fold_params

    # fc1 (+bn1 folded) -> silu
    h = jnp.dot(x_ref[...].astype(mm), w1_ref[...],
                preferred_element_type=jnp.float32) + b1_ref[...]
    h = _silu(h)

    # fc2 (+bn2 folded) -> silu
    h = jnp.dot(h.astype(mm), w2_ref[...],
                preferred_element_type=jnp.float32) + b2_ref[...]
    h = _silu(h)

    # fc3 (+bn3 folded) -> silu -> dropout (identity in eval mode)
    h = jnp.dot(h.astype(mm), w3_ref[...],
                preferred_element_type=jnp.float32) + b3_ref[...]
    h = _silu(h)

    # fc4 (2 outputs zero-padded to OUT_COLS lanes)
    out = jnp.dot(h.astype(mm), w4_ref[...],
                  preferred_element_type=jnp.float32) + b4_ref[...]
    o_ref[...] = out.astype(o_ref.dtype)


def fold_params(p, *, eps=1e-5, matmul_dtype=jnp.bfloat16):
    """Host-side fold of BatchNorm (running stats) + bias into each linear
    layer, zero-padding of fc4 to OUT_COLS columns, and cast of the matmul
    weights to `matmul_dtype` (bf16 by default; biases stay f32)."""

    def fold(w, b, gamma, beta, rmean, rvar):
        scale = gamma / jnp.sqrt(rvar + eps)          # (1, out)
        wf = w * scale                                # per-column scale
        bf = (b - rmean) * scale + beta               # (1, out)
        return wf, bf

    w1, b1 = fold(p["w1"], p["b1"], p["g1"], p["be1"], p["m1"], p["v1"])
    w2, b2 = fold(p["w2"], p["b2"], p["g2"], p["be2"], p["m2"], p["v2"])
    w3, b3 = fold(p["w3"], p["b3"], p["g3"], p["be3"], p["m3"], p["v3"])

    # fc4 has no BN; zero-pad 2 -> OUT_COLS output columns.
    w4 = jnp.zeros((p["w4"].shape[0], OUT_COLS), jnp.float32)
    w4 = w4.at[:, :VALID_OUT].set(p["w4"])
    b4 = jnp.zeros((1, OUT_COLS), jnp.float32).at[:, :VALID_OUT].set(p["b4"])

    cast = lambda w: w.astype(matmul_dtype)
    return dict(w1=cast(w1), b1=b1,
                w2=cast(w2), b2=b2,
                w3=cast(w3), b3=b3,
                w4=cast(w4), b4=b4)


@functools.partial(jax.jit, static_argnames=("block_b",))
def mouse_net_forward(x, kp, *, block_b=2048):
    """x: (B, 10) f32.  kp: folded kernel params from fold_params()."""
    B, f_in = x.shape

    # Batch tile: as large as possible (amortizes ~0.35 us per grid step),
    # but capped at ceil(B/2) so the grid has >= 2 steps whenever B spans
    # more than one tile -> both v7x TensorCores get work under ("parallel",).
    tb = max(8, min(_round_up(block_b, 8), _round_up(B, 8)))
    tb = max(8, min(tb, _round_up(pl.cdiv(B, 2), 8)))
    bp = _round_up(B, tb)
    if bp != B:
        x = jnp.pad(x, ((0, bp - B), (0, 0)))

    def batch_spec(feat):
        return pl.BlockSpec((tb, feat), lambda i: (i, 0))

    def const_spec(arr):
        # Constant index_map -> weights/biases stay VMEM-resident across steps.
        return pl.BlockSpec(arr.shape, lambda i: (0, 0))

    inputs = (x,
              kp["w1"], kp["b1"],
              kp["w2"], kp["b2"],
              kp["w3"], kp["b3"],
              kp["w4"], kp["b4"])
    in_specs = [batch_spec(f_in)] + [const_spec(a) for a in inputs[1:]]

    out = pl.pallas_call(
        mouse_net_kernel,
        grid=(bp // tb,),
        out_shape=jax.ShapeDtypeStruct((bp, OUT_COLS), jnp.float32),
        in_specs=in_specs,
        out_specs=batch_spec(OUT_COLS),
        compiler_params=pltpu.CompilerParams(
            dimension_semantics=("parallel",),
            vmem_limit_bytes=32 * 1024 * 1024,
        ),
    )(*inputs)
    return out[:B, :VALID_OUT]


def init_params(key):
    """Deterministic synthetic parameters matching Mouse_net's shapes,
    including non-trivial BatchNorm running stats so the fold is exercised."""
    ks = jax.random.split(key, 20)
    it = iter(ks)

    def linear(fan_in, fan_out):
        bound = 1.0 / jnp.sqrt(jnp.float32(fan_in))
        w = jax.random.uniform(next(it), (fan_in, fan_out), jnp.float32, -bound, bound)
        b = jax.random.uniform(next(it), (1, fan_out), jnp.float32, -bound, bound)
        return w, b

    def bn(n):
        gamma = 1.0 + 0.1 * jax.random.normal(next(it), (1, n), jnp.float32)
        beta = 0.1 * jax.random.normal(next(it), (1, n), jnp.float32)
        rmean = 0.1 * jax.random.normal(next(it), (1, n), jnp.float32)
        rvar = jnp.abs(1.0 + 0.1 * jax.random.normal(next(it), (1, n), jnp.float32))
        return gamma, beta, rmean, rvar

    w1, b1 = linear(10, 256)
    g1, be1, m1, v1 = bn(256)
    w2, b2 = linear(256, 256)
    g2, be2, m2, v2 = bn(256)
    w3, b3 = linear(256, 128)
    g3, be3, m3, v3 = bn(128)
    w4, b4 = linear(128, 2)

    return dict(w1=w1, b1=b1, g1=g1, be1=be1, m1=m1, v1=v1,
                w2=w2, b2=b2, g2=g2, be2=be2, m2=m2, v2=v2,
                w3=w3, b3=b3, g3=g3, be3=be3, m3=m3, v3=v3,
                w4=w4, b4=b4)


def reference_forward(x, p, eps=1e-5):
    """Pure-JAX eval-mode reference with explicit (unfolded) BatchNorm."""
    def bn(h, g, be, m, v):
        return (h - m) / jnp.sqrt(v + eps) * g + be

    h = jax.nn.silu(bn(x @ p["w1"] + p["b1"], p["g1"], p["be1"], p["m1"], p["v1"]))
    h = jax.nn.silu(bn(h @ p["w2"] + p["b2"], p["g2"], p["be2"], p["m2"], p["v2"]))
    h = jax.nn.silu(bn(h @ p["w3"] + p["b3"], p["g3"], p["be3"], p["m3"], p["v3"]))
    return h @ p["w4"] + p["b4"]


if __name__ == "__main__":
    key = jax.random.PRNGKey(0)
    kx, kparam = jax.random.split(key)

    B = 8  # small batch
    x = jax.random.normal(kx, (B, 10), jnp.float32)

    params = init_params(kparam)
    ref = reference_forward(x, params)

    # f32 matmul path: tight check of the BN/bias fold + output padding.
    out_f32 = jax.block_until_ready(
        mouse_net_forward(x, fold_params(params, matmul_dtype=jnp.float32)))
    assert out_f32.shape == (B, 2)
    err_f32 = float(jnp.max(jnp.abs(out_f32 - ref)))
    assert jnp.allclose(out_f32, ref, atol=1e-2, rtol=1e-2), err_f32

    # Default bf16 matmul path (MXU-native on v5e/v6e/v7x): looser tolerance.
    out_bf16 = jax.block_until_ready(mouse_net_forward(x, fold_params(params)))
    assert out_bf16.shape == (B, 2)
    err_bf16 = float(jnp.max(jnp.abs(out_bf16 - ref)))
    assert jnp.allclose(out_bf16, ref, atol=6e-2, rtol=6e-2), err_bf16

    print("KERNEL_OK")
</pallas_src>

<mosaic_0001>
module attributes {stable_mosaic.version = 11 : i64} {
  func.func @mouse_net_kernel(%arg0: i32, %arg1: memref<8x10xf32, #tpu.memory_space<vmem>>, %arg2: memref<10x256xf32, #tpu.memory_space<vmem>>, %arg3: memref<1x256xf32, #tpu.memory_space<vmem>>, %arg4: memref<256x256xf32, #tpu.memory_space<vmem>>, %arg5: memref<1x256xf32, #tpu.memory_space<vmem>>, %arg6: memref<256x128xf32, #tpu.memory_space<vmem>>, %arg7: memref<1x128xf32, #tpu.memory_space<vmem>>, %arg8: memref<128x8xf32, #tpu.memory_space<vmem>>, %arg9: memref<1x8xf32, #tpu.memory_space<vmem>>, %arg10: memref<8x8xf32, #tpu.memory_space<vmem>>) attributes {dimension_semantics = [#tpu.dimension_semantics<parallel>], iteration_bounds = array<i64: 1>, scalar_prefetch = 0 : i64, scratch_operands = 0 : i64, tpu.core_type = #tpu.core_type<tc>, window_params = [{transform_indices = @transform_0, window_bounds = array<i64: 8, 10>}, {pipeline_mode = #tpu.pipeline_mode<synchronous>, transform_indices = @transform_1, window_bounds = array<i64: 10, 256>}, {pipeline_mode = #tpu.pipeline_mode<synchronous>, transform_indices = @transform_2, window_bounds = array<i64: 1, 256>}, {pipeline_mode = #tpu.pipeline_mode<synchronous>, transform_indices = @transform_3, window_bounds = array<i64: 256, 256>}, {pipeline_mode = #tpu.pipeline_mode<synchronous>, transform_indices = @transform_4, window_bounds = array<i64: 1, 256>}, {pipeline_mode = #tpu.pipeline_mode<synchronous>, transform_indices = @transform_5, window_bounds = array<i64: 256, 128>}, {pipeline_mode = #tpu.pipeline_mode<synchronous>, transform_indices = @transform_6, window_bounds = array<i64: 1, 128>}, {pipeline_mode = #tpu.pipeline_mode<synchronous>, transform_indices = @transform_7, window_bounds = array<i64: 128, 8>}, {pipeline_mode = #tpu.pipeline_mode<synchronous>, transform_indices = @transform_8, window_bounds = array<i64: 1, 8>}, {transform_indices = @transform_9, window_bounds = array<i64: 8, 8>}]} {
    %c0 = arith.constant 0 : index
    %c0_0 = arith.constant 0 : index
    %0 = vector.load %arg1[%c0, %c0_0] : memref<8x10xf32, #tpu.memory_space<vmem>>, vector<8x10xf32>
    %c0_1 = arith.constant 0 : index
    %c0_2 = arith.constant 0 : index
    %1 = vector.load %arg2[%c0_1, %c0_2] : memref<10x256xf32, #tpu.memory_space<vmem>>, vector<10x256xf32>
    %cst = arith.constant dense<0.000000e+00> : vector<8x256xf32>
    %2 = tpu.matmul %0, %1, %cst {dimension_numbers = #tpu.dot_dimension_numbers<[1], [0], [0], [1], [0, 0, 1, 1], [], []>} : vector<8x10xf32>, vector<10x256xf32>, vector<8x256xf32> -> vector<8x256xf32>
    %c0_3 = arith.constant 0 : index
    %c0_4 = arith.constant 0 : index
    %3 = vector.load %arg3[%c0_3, %c0_4] : memref<1x256xf32, #tpu.memory_space<vmem>>, vector<1x256xf32>
    %4 = vector.broadcast %3 : vector<1x256xf32> to vector<8x256xf32>
    %5 = arith.addf %2, %4 : vector<8x256xf32>
    %cst_5 = arith.constant 0.000000e+00 : f32
    %6 = vector.broadcast %cst_5 : f32 to vector<8x256xf32>
    %7 = arith.subf %6, %5 : vector<8x256xf32>
    %8 = math.exp %7 : vector<8x256xf32>
    %cst_6 = arith.constant 1.000000e+00 : f32
    %9 = vector.broadcast %cst_6 : f32 to vector<8x256xf32>
    %10 = arith.addf %9, %8 : vector<8x256xf32>
    %11 = tpu.reciprocal %10 {approx = true} : vector<8x256xf32> -> vector<8x256xf32>
    %12 = arith.mulf %5, %11 : vector<8x256xf32>
    %c0_7 = arith.constant 0 : index
    %c0_8 = arith.constant 0 : index
    %13 = vector.load %arg4[%c0_7, %c0_8] : memref<256x256xf32, #tpu.memory_space<vmem>>, vector<256x256xf32>
    %cst_9 = arith.constant dense<0.000000e+00> : vector<8x256xf32>
    %14 = tpu.matmul %12, %13, %cst_9 {dimension_numbers = #tpu.dot_dimension_numbers<[1], [0], [0], [1], [0, 0, 1, 1], [], []>} : vector<8x256xf32>, vector<256x256xf32>, vector<8x256xf32> -> vector<8x256xf32>
    %c0_10 = arith.constant 0 : index
    %c0_11 = arith.constant 0 : index
    %15 = vector.load %arg5[%c0_10, %c0_11] : memref<1x256xf32, #tpu.memory_space<vmem>>, vector<1x256xf32>
    %16 = vector.broadcast %15 : vector<1x256xf32> to vector<8x256xf32>
    %17 = arith.addf %14, %16 : vector<8x256xf32>
    %cst_12 = arith.constant 0.000000e+00 : f32
    %18 = vector.broadcast %cst_12 : f32 to vector<8x256xf32>
    %19 = arith.subf %18, %17 : vector<8x256xf32>
    %20 = math.exp %19 : vector<8x256xf32>
    %cst_13 = arith.constant 1.000000e+00 : f32
    %21 = vector.broadcast %cst_13 : f32 to vector<8x256xf32>
    %22 = arith.addf %21, %20 : vector<8x256xf32>
    %23 = tpu.reciprocal %22 {approx = true} : vector<8x256xf32> -> vector<8x256xf32>
    %24 = arith.mulf %17, %23 : vector<8x256xf32>
    %c0_14 = arith.constant 0 : index
    %c0_15 = arith.constant 0 : index
    %25 = vector.load %arg6[%c0_14, %c0_15] : memref<256x128xf32, #tpu.memory_space<vmem>>, vector<256x128xf32>
    %cst_16 = arith.constant dense<0.000000e+00> : vector<8x128xf32>
    %26 = tpu.matmul %24, %25, %cst_16 {dimension_numbers = #tpu.dot_dimension_numbers<[1], [0], [0], [1], [0, 0, 1, 1], [], []>} : vector<8x256xf32>, vector<256x128xf32>, vector<8x128xf32> -> vector<8x128xf32>
    %c0_17 = arith.constant 0 : index
    %c0_18 = arith.constant 0 : index
    %27 = vector.load %arg7[%c0_17, %c0_18] : memref<1x128xf32, #tpu.memory_space<vmem>>, vector<1x128xf32>
    %28 = vector.broadcast %27 : vector<1x128xf32> to vector<8x128xf32>
    %29 = arith.addf %26, %28 : vector<8x128xf32>
    %cst_19 = arith.constant 0.000000e+00 : f32
    %30 = vector.broadcast %cst_19 : f32 to vector<8x128xf32>
    %31 = arith.subf %30, %29 : vector<8x128xf32>
    %32 = math.exp %31 : vector<8x128xf32>
    %cst_20 = arith.constant 1.000000e+00 : f32
    %33 = vector.broadcast %cst_20 : f32 to vector<8x128xf32>
    %34 = arith.addf %33, %32 : vector<8x128xf32>
    %35 = tpu.reciprocal %34 {approx = true} : vector<8x128xf32> -> vector<8x128xf32>
    %36 = arith.mulf %29, %35 : vector<8x128xf32>
    %c0_21 = arith.constant 0 : index
    %c0_22 = arith.constant 0 : index
    %37 = vector.load %arg8[%c0_21, %c0_22] : memref<128x8xf32, #tpu.memory_space<vmem>>, vector<128x8xf32>
    %cst_23 = arith.constant dense<0.000000e+00> : vector<8x8xf32>
    %38 = tpu.matmul %36, %37, %cst_23 {dimension_numbers = #tpu.dot_dimension_numbers<[1], [0], [0], [1], [0, 0, 1, 1], [], []>} : vector<8x128xf32>, vector<128x8xf32>, vector<8x8xf32> -> vector<8x8xf32>
    %c0_24 = arith.constant 0 : index
    %c0_25 = arith.constant 0 : index
    %39 = vector.load %arg9[%c0_24, %c0_25] : memref<1x8xf32, #tpu.memory_space<vmem>>, vector<1x8xf32>
    %40 = vector.broadcast %39 : vector<1x8xf32> to vector<8x8xf32>
    %41 = arith.addf %38, %40 : vector<8x8xf32>
    %c0_26 = arith.constant 0 : index
    %c0_27 = arith.constant 0 : index
    %42 = vector.load %arg10[%c0_26, %c0_27] : memref<8x8xf32, #tpu.memory_space<vmem>>, vector<8x8xf32>
    tpu.vector_store %arg10[%c0_26, %c0_27], %41 {strides = array<i32>} : memref<8x8xf32, #tpu.memory_space<vmem>>, vector<8x8xf32>,
    return
  }
  func.func @transform_0(%arg0: i32) -> (i32, i32) {
    %c0_i32 = arith.constant 0 : i32
    %c0_i32_0 = arith.constant 0 : i32
    return %arg0, %c0_i32 : i32, i32
  }
  func.func @transform_1(%arg0: i32) -> (i32, i32) {
    %c0_i32 = arith.constant 0 : i32
    %c0_i32_0 = arith.constant 0 : i32
    %c0_i32_1 = arith.constant 0 : i32
    return %c0_i32, %c0_i32_0 : i32, i32
  }
  func.func @transform_2(%arg0: i32) -> (i32, i32) {
    %c0_i32 = arith.constant 0 : i32
    %c0_i32_0 = arith.constant 0 : i32
    %c0_i32_1 = arith.constant 0 : i32
    return %c0_i32, %c0_i32_0 : i32, i32
  }
  func.func @transform_3(%arg0: i32) -> (i32, i32) {
    %c0_i32 = arith.constant 0 : i32
    %c0_i32_0 = arith.constant 0 : i32
    %c0_i32_1 = arith.constant 0 : i32
    return %c0_i32, %c0_i32_0 : i32, i32
  }
  func.func @transform_4(%arg0: i32) -> (i32, i32) {
    %c0_i32 = arith.constant 0 : i32
    %c0_i32_0 = arith.constant 0 : i32
    %c0_i32_1 = arith.constant 0 : i32
    return %c0_i32, %c0_i32_0 : i32, i32
  }
  func.func @transform_5(%arg0: i32) -> (i32, i32) {
    %c0_i32 = arith.constant 0 : i32
    %c0_i32_0 = arith.constant 0 : i32
    %c0_i32_1 = arith.constant 0 : i32
    return %c0_i32, %c0_i32_0 : i32, i32
  }
  func.func @transform_6(%arg0: i32) -> (i32, i32) {
    %c0_i32 = arith.constant 0 : i32
    %c0_i32_0 = arith.constant 0 : i32
    %c0_i32_1 = arith.constant 0 : i32
    return %c0_i32, %c0_i32_0 : i32, i32
  }
  func.func @transform_7(%arg0: i32) -> (i32, i32) {
    %c0_i32 = arith.constant 0 : i32
    %c0_i32_0 = arith.constant 0 : i32
    %c0_i32_1 = arith.constant 0 : i32
    return %c0_i32, %c0_i32_0 : i32, i32
  }
  func.func @transform_8(%arg0: i32) -> (i32, i32) {
    %c0_i32 = arith.constant 0 : i32
    %c0_i32_0 = arith.constant 0 : i32
    %c0_i32_1 = arith.constant 0 : i32
    return %c0_i32, %c0_i32_0 : i32, i32
  }
  func.func @transform_9(%arg0: i32) -> (i32, i32) {
    %c0_i32 = arith.constant 0 : i32
    %c0_i32_0 = arith.constant 0 : i32
    return %arg0, %c0_i32 : i32, i32
  }
}

</mosaic_0001>

<llo_original>
// kernel: mouse_net_forward.1
$region0: #{mouse_net_forward.1}
  #allocation0 [shape = 'u32[]', space=smem, size = 0x4, offset = 0x4, fixed_abs, tag = 'smem constant byte address 0x4 - core index']
  #allocation1 [shape = 'u32[144,128]{1,0:T(1,128)}', space=vmem, size = 0x12000, scoped, tag = 'internal scratch']
  %s0 = inlined_call_operand.vmem [shape: f32[8,10], index: 0, kind: input, shape index: {}]
  %s1 = inlined_call_operand.vmem [shape: f32[10,256], index: 1, kind: input, shape index: {}]
  %s2 = inlined_call_operand.vmem [shape: f32[1,256], index: 2, kind: input, shape index: {}]
  %s3 = inlined_call_operand.hbm [shape: f32[256,256], index: 3, kind: input, shape index: {}]
  %s4 = inlined_call_operand.vmem [shape: f32[1,256], index: 4, kind: input, shape index: {}]
  %s5 = inlined_call_operand.hbm [shape: f32[256,128], index: 5, kind: input, shape index: {}]
  %s6 = inlined_call_operand.vmem [shape: f32[1,128], index: 6, kind: input, shape index: {}]
  %s7 = inlined_call_operand.vmem [shape: f32[128,8], index: 7, kind: input, shape index: {}]
  %s8 = inlined_call_operand.vmem [shape: f32[1,8], index: 8, kind: input, shape index: {}]
  %s9 = inlined_call_operand.vmem [shape: f32[8,8], index: 9, kind: output, shape index: {}]
  %s10 = sld [smem:[#allocation0]]
  $region54: #{mouse_net_forward.1} parent=0
    _
  %s12 = ssub.s32 1, %s10
  %s13 = scalar_select 0, %s12, %s10
  $region1: #{mouse_net_forward.1} parent=0
    #allocation2 [shape = 'u8[262144]{0}', space=vmem, size = 0x40000, scoped, tag = 'input window, operand 3, single buffered']
    #allocation3 [shape = 's32[1]{0}', space=sflag, size = 0x4, scoped, tag = 'scoped memory for mouse_net_forward.1']
    #allocation4 [shape = 'u8[131072]{0}', space=vmem, size = 0x20000, scoped, tag = 'input window, operand 5, single buffered']
    #allocation5 [shape = 's32[1]{0}', space=sflag, size = 0x4, scoped, tag = 'scoped memory for mouse_net_forward.1']
    %14 = vsyncpa [#allocation3], 0
    %15 = vsyncpa [#allocation5], 0
    // Predicated region
    $region2: #{mouse_net_forward.1} parent=1 // pred_check
      _
    $region3: #{mouse_net_forward.1} parent=1 // pred_check_branch
      %17 = sbr.rel (0) target = $region5
    $region4: #{mouse_net_forward.1} parent=1 // pred_region
      _
    $region5: #{mouse_net_forward.1} parent=1 // pred_fallthru
      _
    // Predicated region
    $region6: #{mouse_net_forward.1} parent=1 // pred_check
      _
    $region7: #{mouse_net_forward.1} parent=1 // pred_check_branch
      %19 = sbr.rel (0) target = $region9
    $region8: #{mouse_net_forward.1} parent=1 // pred_region
      _
    $region9: #{mouse_net_forward.1} parent=1 // pred_fallthru
      _
    // Predicated region
    $region10: #{mouse_net_forward.1} parent=1 // pred_check
      _
    $region11: #{mouse_net_forward.1} parent=1 // pred_check_branch
      %21 = sbr.rel (0) target = $region13
    $region12: #{mouse_net_forward.1} parent=1 // pred_region
      _
    $region13: #{mouse_net_forward.1} parent=1 // pred_fallthru
      _
    // Predicated region
    $region14: #{mouse_net_forward.1} parent=1 // pred_check
      _
    $region15: #{mouse_net_forward.1} parent=1 // pred_check_branch
      %23 = sbr.rel (0) target = $region17
    $region16: #{mouse_net_forward.1} parent=1 // pred_region
      %s25 = ssub.s32 8192, 8192
      %26 = vsyncadd [#allocation3], %s25
      %s27 = sshll.u32 [#allocation2], 4
      %s28 = int_to_ptr.vmem [resolvable:$true] %s27
      %33 = dma.hbm_to_vmem [thread:$0]  %s3, 8192, %s28, [#allocation3], 256, 256, 16
    $region17: #{mouse_net_forward.1} parent=1 // pred_fallthru
      _
    // Predicated region
    $region18: #{mouse_net_forward.1} parent=1 // pred_check
      _
    $region19: #{mouse_net_forward.1} parent=1 // pred_check_branch
      %35 = sbr.rel (0) target = $region21
    $region20: #{mouse_net_forward.1} parent=1 // pred_region
      _
    $region21: #{mouse_net_forward.1} parent=1 // pred_fallthru
      _
    // Predicated region
    $region22: #{mouse_net_forward.1} parent=1 // pred_check
      _
    $region23: #{mouse_net_forward.1} parent=1 // pred_check_branch
      %37 = sbr.rel (0) target = $region25
    $region24: #{mouse_net_forward.1} parent=1 // pred_region
      %s39 = ssub.s32 4096, 4096
      %40 = vsyncadd [#allocation5], %s39
      %s41 = sshll.u32 [#allocation4], 4
      %s42 = int_to_ptr.vmem [resolvable:$true] %s41
      %47 = dma.hbm_to_vmem [thread:$0]  %s5, 4096, %s42, [#allocation5], 128, 128, 8
    $region25: #{mouse_net_forward.1} parent=1 // pred_fallthru
      _
    // Predicated region
    $region26: #{mouse_net_forward.1} parent=1 // pred_check
      _
    $region27: #{mouse_net_forward.1} parent=1 // pred_check_branch
      %49 = sbr.rel (0) target = $region29
    $region28: #{mouse_net_forward.1} parent=1 // pred_region
      _
    $region29: #{mouse_net_forward.1} parent=1 // pred_fallthru
      _
    // Predicated region
    $region30: #{mouse_net_forward.1} parent=1 // pred_check
      _
    $region31: #{mouse_net_forward.1} parent=1 // pred_check_branch
      %51 = sbr.rel (0) target = $region33
    $region32: #{mouse_net_forward.1} parent=1 // pred_region
      _
    $region33: #{mouse_net_forward.1} parent=1 // pred_fallthru
      _
    // Predicated region
    $region34: #{mouse_net_forward.1} parent=1 // pred_check
      _
    $region35: #{mouse_net_forward.1} parent=1 // pred_check_branch
      %53 = sbr.rel (0) target = $region37
    $region36: #{mouse_net_forward.1} parent=1 // pred_region
      _
    $region37: #{mouse_net_forward.1} parent=1 // pred_fallthru
      _
    // Predicated region
    $region38: #{mouse_net_forward.1} parent=1 // pred_check
      _
    $region39: #{mouse_net_forward.1} parent=1 // pred_check_branch
      %55 = sbr.rel (0) target = $region41
    $region40: #{mouse_net_forward.1} parent=1 // pred_region
      %56 = dma.done [#allocation3], 8192
    $region41: #{mouse_net_forward.1} parent=1 // pred_fallthru
      _
    // Predicated region
    $region42: #{mouse_net_forward.1} parent=1 // pred_check
      _
    $region43: #{mouse_net_forward.1} parent=1 // pred_check_branch
      %58 = sbr.rel (0) target = $region45
    $region44: #{mouse_net_forward.1} parent=1 // pred_region
      %59 = dma.done [#allocation5], 4096
    $region45: #{mouse_net_forward.1} parent=1 // pred_fallthru
      _
    %v60 = vld [vmem:[%s0] sm:$0xff]
    %v61 = vld [vmem:[%s1] sm:$0xff]
    %v62 = vld [vmem:[%s1 + $0x8] sm:$0xff]
    %v63 = vld [vmem:[%s1 + $0x10] sm:$0x3]
    %v64 = vld [vmem:[%s1 + $0x18] sm:$0x3]
    %v65 = vld [vmem:[%s2] sm:$0x3]
    %v67 = vlaneseq
    %v68 = vshrl.u32 %v67, 7
    %v69 = vsub.s32 0, %v68
    %v70 = vrot.slane %v65, %v69
    %v71 = vlaneseq
    %v72 = vshrl.u32 %v71, 7
    %v73 = vsub.s32 1, %v72
    %v74 = vrot.slane %v65, %v73
    %vm77 = vcmask 80896
    %v79 = vsel %vm77, %v60, 0
    %vm81 = vcmask 1041408
    %v83 = vsel %vm81, %v63, 0
    %v86 = vsel %vm81, %v64, 0
    %88 = vmatprep.subr.mxu0 0.0
    %89 = vmatpush1.msra.mxu0 0.0
    %90 = vmatprep.subr.mxu0 0.0
    %91 = vmatpush1.msra.mxu0 0.0
    %92 = vmatprep.subr.mxu0 0.0
    %93 = vmatpush1.msra.mxu0 0.0
    %94 = vmatprep.subr.mxu0 0.0
    %95 = vmatpush1.msra.mxu0 0.0
    %96 = vmatprep.subr.mxu0 0.0
    %97 = vmatpush1.msra.mxu0 0.0
    %98 = vmatprep.subr.mxu0 0.0
    %99 = vmatpush1.msra.mxu0 0.0
    %100 = vmatprep.subr.mxu0 0.0
    %101 = vmatpush1.msra.mxu0 0.0
    %102 = vmatprep.subr.mxu0 0.0
    %103 = vmatpush1.msra.mxu0 0.0
    %104 = vmatprep.subr.mxu0 0.0
    %105 = vmatpush1.msra.mxu0 0.0
    %106 = vmatprep.subr.mxu0 0.0
    %107 = vmatpush1.msra.mxu0 0.0
    %108 = vmatprep.subr.mxu0 0.0
    %109 = vmatpush1.msra.mxu0 0.0
    %110 = vmatprep.subr.mxu0 0.0
    %111 = vmatpush1.msra.mxu0 0.0
    %112 = vmatprep.subr.mxu0 0.0
    %113 = vmatpush1.msra.mxu0 0.0
    %114 = vmatprep.subr.mxu0 0.0
    %115 = vmatpush1.msra.mxu0 0.0
    %116 = vmatprep.subr.mxu0 %v86
    %117 = vmatpush1.msra.mxu0 %v83
    %118 = vmatprep.subr.mxu0 %v62
    %119 = vmatpush1.msra.mxu0 %v61
    %120 = vmatprep.subr.mxu0 0.0
    %121 = vmatpush2.msra.mxu0 0.0
    %122 = vmatprep.subr.mxu0 0.0
    %123 = vmatpush2.msra.mxu0 0.0
    %124 = vmatprep.subr.mxu0 0.0
    %125 = vmatpush2.msra.mxu0 0.0
    %126 = vmatprep.subr.mxu0 0.0
    %127 = vmatpush2.msra.mxu0 0.0
    %128 = vmatprep.subr.mxu0 0.0
    %129 = vmatpush2.msra.mxu0 0.0
    %130 = vmatprep.subr.mxu0 0.0
    %131 = vmatpush2.msra.mxu0 0.0
    %132 = vmatprep.subr.mxu0 0.0
    %133 = vmatpush2.msra.mxu0 0.0
    %134 = vmatprep.subr.mxu0 0.0
    %135 = vmatpush2.msra.mxu0 0.0
    %136 = vmatprep.subr.mxu0 0.0
    %137 = vmatpush2.msra.mxu0 0.0
    %138 = vmatprep.subr.mxu0 0.0
    %139 = vmatpush2.msra.mxu0 0.0
    %140 = vmatprep.subr.mxu0 0.0
    %141 = vmatpush2.msra.mxu0 0.0
    %142 = vmatprep.subr.mxu0 0.0
    %143 = vmatpush2.msra.mxu0 0.0
    %144 = vmatprep.subr.mxu0 0.0
    %145 = vmatpush2.msra.mxu0 0.0
    %146 = vmatprep.subr.mxu0 0.0
    %147 = vmatpush2.msra.mxu0 0.0
    %148 = vmatprep.subr.mxu0 0.0
    %149 = vmatpush2.msra.mxu0 0.0
    %150 = vmatprep.subr.mxu0 0.0
    %151 = vmatpush2.msra.mxu0 0.0
    %152 = vmatprep.mubr.f32.mxu0 0.0
    %153 = vmatmul.mubr.f32.gmra.mxu0 %v79
    %v154 = vpop.f32.mrf.mxu0
    %v155 = vadd.f32 %v70, %v154
    %v156 = vpop.f32.mrf.mxu0
    %v157 = vadd.f32 %v74, %v156
    %158 = vdwg.mxu0
    %v159 = vsub.f32 0.0, %v155
    %v160 = vsub.f32 0.0, %v157
    %v161 = vmul.f32 %v159, 1.442695
    %v162 = vpow.pop %v161
    %v163 = vmul.f32 %v160, 1.442695
    %v164 = vpow.pop %v163
    %v165 = vadd.f32 %v162, 1.0
    %v166 = vadd.f32 %v164, 1.0
    %v167 = vrcp.pop %v165
    %v168 = vrcp.pop %v166
    %v169 = vmul.f32 %v155, %v167
    %v170 = vmul.f32 %v157, %v168
    %v171 = vld [vmem:[#allocation2] sm:$0xff]
    %v172 = vld [vmem:[#allocation2 + $0x8] sm:$0xff]
    %v173 = vld [vmem:[#allocation2 + $0x10] sm:$0xff]
    %v174 = vld [vmem:[#allocation2 + $0x18] sm:$0xff]
    %v175 = vld [vmem:[#allocation2 + $0x20] sm:$0xff]
    %v176 = vld [vmem:[#allocation2 + $0x28] sm:$0xff]
    %v177 = vld [vmem:[#allocation2 + $0x30] sm:$0xff]
    %v178 = vld [vmem:[#allocation2 + $0x38] sm:$0xff]
    %v179 = vld [vmem:[#allocation2 + $0x40] sm:$0xff]
    %v180 = vld [vmem:[#allocation2 + $0x48] sm:$0xff]
    %v181 = vld [vmem:[#allocation2 + $0x50] sm:$0xff]
    %v182 = vld [vmem:[#allocation2 + $0x58] sm:$0xff]
    %v183 = vld [vmem:[#allocation2 + $0x60] sm:$0xff]
    %v184 = vld [vmem:[#allocation2 + $0x68] sm:$0xff]
    %v185 = vld [vmem:[#allocation2 + $0x70] sm:$0xff]
    %v186 = vld [vmem:[#allocation2 + $0x78] sm:$0xff]
    %v187 = vld [vmem:[#allocation2 + $0x80] sm:$0xff]
    %v188 = vld [vmem:[#allocation2 + $0x88] sm:$0xff]
    %v189 = vld [vmem:[#allocation2 + $0x90] sm:$0xff]
    %v190 = vld [vmem:[#allocation2 + $0x98] sm:$0xff]
    %v191 = vld [vmem:[#allocation2 + $0xa0] sm:$0xff]
    %v192 = vld [vmem:[#allocation2 + $0xa8] sm:$0xff]
    %v193 = vld [vmem:[#allocation2 + $0xb0] sm:$0xff]
    %v194 = vld [vmem:[#allocation2 + $0xb8] sm:$0xff]
    %v195 = vld [vmem:[#allocation2 + $0xc0] sm:$0xff]
    %v196 = vld [vmem:[#allocation2 + $0xc8] sm:$0xff]
    %v197 = vld [vmem:[#allocation2 + $0xd0] sm:$0xff]
    %v198 = vld [vmem:[#allocation2 + $0xd8] sm:$0xff]
    %v199 = vld [vmem:[#allocation2 + $0xe0] sm:$0xff]
    %v200 = vld [vmem:[#allocation2 + $0xe8] sm:$0xff]
    %v201 = vld [vmem:[#allocation2 + $0xf0] sm:$0xff]
    %v202 = vld [vmem:[#allocation2 + $0xf8] sm:$0xff]
    %v203 = vld [vmem:[#allocation2 + $0x100] sm:$0xff]
    %v204 = vld [vmem:[#allocation2 + $0x108] sm:$0xff]
    %v205 = vld [vmem:[#allocation2 + $0x110] sm:$0xff]
    %v206 = vld [vmem:[#allocation2 + $0x118] sm:$0xff]
    %v207 = vld [vmem:[#allocation2 + $0x120] sm:$0xff]
    %v208 = vld [vmem:[#allocation2 + $0x128] sm:$0xff]
    %v209 = vld [vmem:[#allocation2 + $0x130] sm:$0xff]
    %v210 = vld [vmem:[#allocation2 + $0x138] sm:$0xff]
    %v211 = vld [vmem:[#allocation2 + $0x140] sm:$0xff]
    %v212 = vld [vmem:[#allocation2 + $0x148] sm:$0xff]
    %v213 = vld [vmem:[#allocation2 + $0x150] sm:$0xff]
    %v214 = vld [vmem:[#allocation2 + $0x158] sm:$0xff]
    %v215 = vld [vmem:[#allocation2 + $0x160] sm:$0xff]
    %v216 = vld [vmem:[#allocation2 + $0x168] sm:$0xff]
    %v217 = vld [vmem:[#allocation2 + $0x170] sm:$0xff]
    %v218 = vld [vmem:[#allocation2 + $0x178] sm:$0xff]
    %v219 = vld [vmem:[#allocation2 + $0x180] sm:$0xff]
    %v220 = vld [vmem:[#allocation2 + $0x188] sm:$0xff]
    %v221 = vld [vmem:[#allocation2 + $0x190] sm:$0xff]
    %v222 = vld [vmem:[#allocation2 + $0x198] sm:$0xff]
    %v223 = vld [vmem:[#allocation2 + $0x1a0] sm:$0xff]
    %v224 = vld [vmem:[#allocation2 + $0x1a8] sm:$0xff]
    %v225 = vld [vmem:[#allocation2 + $0x1b0] sm:$0xff]
    %v226 = vld [vmem:[#allocation2 + $0x1b8] sm:$0xff]
    %v227 = vld [vmem:[#allocation2 + $0x1c0] sm:$0xff]
    %v228 = vld [vmem:[#allocation2 + $0x1c8] sm:$0xff]
    %v229 = vld [vmem:[#allocation2 + $0x1d0] sm:$0xff]
    %v230 = vld [vmem:[#allocation2 + $0x1d8] sm:$0xff]
    %v231 = vld [vmem:[#allocation2 + $0x1e0] sm:$0xff]
    %v232 = vld [vmem:[#allocation2 + $0x1e8] sm:$0xff]
    %v233 = vld [vmem:[#allocation2 + $0x1f0] sm:$0xff]
    %v234 = vld [vmem:[#allocation2 + $0x1f8] sm:$0xff]
    %v235 = vld [vmem:[%s4] sm:$0x3]
    %v237 = vlaneseq
    %v238 = vshrl.u32 %v237, 7
    %v239 = vsub.s32 0, %v238
    %v240 = vrot.slane %v235, %v239
    %v241 = vlaneseq
    %v242 = vshrl.u32 %v241, 7
    %v243 = vsub.s32 1, %v242
    %v244 = vrot.slane %v235, %v243
    %247 = vmatprep.subr.mxu0 %v202
    %248 = vmatpush1.msra.mxu0 %v201
    %249 = vmatprep.subr.mxu0 %v200
    %250 = vmatpush1.msra.mxu0 %v199
    %251 = vmatprep.subr.mxu0 %v198
    %252 = vmatpush1.msra.mxu0 %v197
    %253 = vmatprep.subr.mxu0 %v196
    %254 = vmatpush1.msra.mxu0 %v195
    %255 = vmatprep.subr.mxu0 %v194
    %256 = vmatpush1.msra.mxu0 %v193
    %257 = vmatprep.subr.mxu0 %v192
    %258 = vmatpush1.msra.mxu0 %v191
    %259 = vmatprep.subr.mxu0 %v190
    %260 = vmatpush1.msra.mxu0 %v189
    %261 = vmatprep.subr.mxu0 %v188
    %262 = vmatpush1.msra.mxu0 %v187
    %263 = vmatprep.subr.mxu0 %v186
    %264 = vmatpush1.msra.mxu0 %v185
    %265 = vmatprep.subr.mxu0 %v184
    %266 = vmatpush1.msra.mxu0 %v183
    %267 = vmatprep.subr.mxu0 %v182
    %268 = vmatpush1.msra.mxu0 %v181
    %269 = vmatprep.subr.mxu0 %v180
    %270 = vmatpush1.msra.mxu0 %v179
    %271 = vmatprep.subr.mxu0 %v178
    %272 = vmatpush1.msra.mxu0 %v177
    %273 = vmatprep.subr.mxu0 %v176
    %274 = vmatpush1.msra.mxu0 %v175
    %275 = vmatprep.subr.mxu0 %v174
    %276 = vmatpush1.msra.mxu0 %v173
    %277 = vmatprep.subr.mxu0 %v172
    %278 = vmatpush1.msra.mxu0 %v171
    %279 = vmatprep.subr.mxu0 %v234
    %280 = vmatpush2.msra.mxu0 %v233
    %281 = vmatprep.subr.mxu0 %v232
    %282 = vmatpush2.msra.mxu0 %v231
    %283 = vmatprep.subr.mxu0 %v230
    %284 = vmatpush2.msra.mxu0 %v229
    %285 = vmatprep.subr.mxu0 %v228
    %286 = vmatpush2.msra.mxu0 %v227
    %287 = vmatprep.subr.mxu0 %v226
    %288 = vmatpush2.msra.mxu0 %v225
    %289 = vmatprep.subr.mxu0 %v224
    %290 = vmatpush2.msra.mxu0 %v223
    %291 = vmatprep.subr.mxu0 %v222
    %292 = vmatpush2.msra.mxu0 %v221
    %293 = vmatprep.subr.mxu0 %v220
    %294 = vmatpush2.msra.mxu0 %v219
    %295 = vmatprep.subr.mxu0 %v218
    %296 = vmatpush2.msra.mxu0 %v217
    %297 = vmatprep.subr.mxu0 %v216
    %298 = vmatpush2.msra.mxu0 %v215
    %299 = vmatprep.subr.mxu0 %v214
    %300 = vmatpush2.msra.mxu0 %v213
    %301 = vmatprep.subr.mxu0 %v212
    %302 = vmatpush2.msra.mxu0 %v211
    %303 = vmatprep.subr.mxu0 %v210
    %304 = vmatpush2.msra.mxu0 %v209
    %305 = vmatprep.subr.mxu0 %v208
    %306 = vmatpush2.msra.mxu0 %v207
    %307 = vmatprep.subr.mxu0 %v206
    %308 = vmatpush2.msra.mxu0 %v205
    %309 = vmatprep.subr.mxu0 %v204
    %310 = vmatpush2.msra.mxu0 %v203
    %311 = vmatprep.mubr.f32.mxu0 %v170
    %312 = vmatmul.mubr.f32.gmra.mxu0 %v169
    %v313 = vpop.f32.mrf.mxu0
    %v314 = vadd.f32 %v240, %v313
    %v315 = vpop.f32.mrf.mxu0
    %v316 = vadd.f32 %v244, %v315
    %317 = vdwg.mxu0
    %v318 = vsub.f32 0.0, %v314
    %v319 = vsub.f32 0.0, %v316
    %v320 = vmul.f32 %v318, 1.442695
    %v321 = vpow.pop %v320
    %v322 = vmul.f32 %v319, 1.442695
    %v323 = vpow.pop %v322
    %v324 = vadd.f32 %v321, 1.0
    %v325 = vadd.f32 %v323, 1.0
    %v326 = vrcp.pop %v324
    %v327 = vrcp.pop %v325
    %v328 = vmul.f32 %v314, %v326
    %v329 = vmul.f32 %v316, %v327
    %v330 = vld [vmem:[#allocation4] sm:$0xff]
    %v331 = vld [vmem:[#allocation4 + $0x8] sm:$0xff]
    %v332 = vld [vmem:[#allocation4 + $0x10] sm:$0xff]
    %v333 = vld [vmem:[#allocation4 + $0x18] sm:$0xff]
    %v334 = vld [vmem:[#allocation4 + $0x20] sm:$0xff]
    %v335 = vld [vmem:[#allocation4 + $0x28] sm:$0xff]
    %v336 = vld [vmem:[#allocation4 + $0x30] sm:$0xff]
    %v337 = vld [vmem:[#allocation4 + $0x38] sm:$0xff]
    %v338 = vld [vmem:[#allocation4 + $0x40] sm:$0xff]
    %v339 = vld [vmem:[#allocation4 + $0x48] sm:$0xff]
    %v340 = vld [vmem:[#allocation4 + $0x50] sm:$0xff]
    %v341 = vld [vmem:[#allocation4 + $0x58] sm:$0xff]
    %v342 = vld [vmem:[#allocation4 + $0x60] sm:$0xff]
    %v343 = vld [vmem:[#allocation4 + $0x68] sm:$0xff]
    %v344 = vld [vmem:[#allocation4 + $0x70] sm:$0xff]
    %v345 = vld [vmem:[#allocation4 + $0x78] sm:$0xff]
    %v346 = vld [vmem:[#allocation4 + $0x80] sm:$0xff]
    %v347 = vld [vmem:[#allocation4 + $0x88] sm:$0xff]
    %v348 = vld [vmem:[#allocation4 + $0x90] sm:$0xff]
    %v349 = vld [vmem:[#allocation4 + $0x98] sm:$0xff]
    %v350 = vld [vmem:[#allocation4 + $0xa0] sm:$0xff]
    %v351 = vld [vmem:[#allocation4 + $0xa8] sm:$0xff]
    %v352 = vld [vmem:[#allocation4 + $0xb0] sm:$0xff]
    %v353 = vld [vmem:[#allocation4 + $0xb8] sm:$0xff]
    %v354 = vld [vmem:[#allocation4 + $0xc0] sm:$0xff]
    %v355 = vld [vmem:[#allocation4 + $0xc8] sm:$0xff]
    %v356 = vld [vmem:[#allocation4 + $0xd0] sm:$0xff]
    %v357 = vld [vmem:[#allocation4 + $0xd8] sm:$0xff]
    %v358 = vld [vmem:[#allocation4 + $0xe0] sm:$0xff]
    %v359 = vld [vmem:[#allocation4 + $0xe8] sm:$0xff]
    %v360 = vld [vmem:[#allocation4 + $0xf0] sm:$0xff]
    %v361 = vld [vmem:[#allocation4 + $0xf8] sm:$0xff]
    %v362 = vld [vmem:[%s6] sm:$0x1]
    %v364 = vlaneseq
    %v365 = vshrl.u32 %v364, 7
    %v366 = vsub.s32 0, %v365
    %v367 = vrot.slane %v362, %v366
    %369 = vmatprep.subr.mxu0 0.0
    %370 = vmatpush1.msra.mxu0 %v345
    %371 = vmatprep.subr.mxu0 0.0
    %372 = vmatpush1.msra.mxu0 %v344
    %373 = vmatprep.subr.mxu0 0.0
    %374 = vmatpush1.msra.mxu0 %v343
    %375 = vmatprep.subr.mxu0 0.0
    %376 = vmatpush1.msra.mxu0 %v342
    %377 = vmatprep.subr.mxu0 0.0
    %378 = vmatpush1.msra.mxu0 %v341
    %379 = vmatprep.subr.mxu0 0.0
    %380 = vmatpush1.msra.mxu0 %v340
    %381 = vmatprep.subr.mxu0 0.0
    %382 = vmatpush1.msra.mxu0 %v339
    %383 = vmatprep.subr.mxu0 0.0
    %384 = vmatpush1.msra.mxu0 %v338
    %385 = vmatprep.subr.mxu0 0.0
    %386 = vmatpush1.msra.mxu0 %v337
    %387 = vmatprep.subr.mxu0 0.0
    %388 = vmatpush1.msra.mxu0 %v336
    %389 = vmatprep.subr.mxu0 0.0
    %390 = vmatpush1.msra.mxu0 %v335
    %391 = vmatprep.subr.mxu0 0.0
    %392 = vmatpush1.msra.mxu0 %v334
    %393 = vmatprep.subr.mxu0 0.0
    %394 = vmatpush1.msra.mxu0 %v333
    %395 = vmatprep.subr.mxu0 0.0
    %396 = vmatpush1.msra.mxu0 %v332
    %397 = vmatprep.subr.mxu0 0.0
    %398 = vmatpush1.msra.mxu0 %v331
    %399 = vmatprep.subr.mxu0 0.0
    %400 = vmatpush1.msra.mxu0 %v330
    %401 = vmatprep.subr.mxu0 0.0
    %402 = vmatpush2.msra.mxu0 %v361
    %403 = vmatprep.subr.mxu0 0.0
    %404 = vmatpush2.msra.mxu0 %v360
    %405 = vmatprep.subr.mxu0 0.0
    %406 = vmatpush2.msra.mxu0 %v359
    %407 = vmatprep.subr.mxu0 0.0
    %408 = vmatpush2.msra.mxu0 %v358
    %409 = vmatprep.subr.mxu0 0.0
    %410 = vmatpush2.msra.mxu0 %v357
    %411 = vmatprep.subr.mxu0 0.0
    %412 = vmatpush2.msra.mxu0 %v356
    %413 = vmatprep.subr.mxu0 0.0
    %414 = vmatpush2.msra.mxu0 %v355
    %415 = vmatprep.subr.mxu0 0.0
    %416 = vmatpush2.msra.mxu0 %v354
    %417 = vmatprep.subr.mxu0 0.0
    %418 = vmatpush2.msra.mxu0 %v353
    %419 = vmatprep.subr.mxu0 0.0
    %420 = vmatpush2.msra.mxu0 %v352
    %421 = vmatprep.subr.mxu0 0.0
    %422 = vmatpush2.msra.mxu0 %v351
    %423 = vmatprep.subr.mxu0 0.0
    %424 = vmatpush2.msra.mxu0 %v350
    %425 = vmatprep.subr.mxu0 0.0
    %426 = vmatpush2.msra.mxu0 %v349
    %427 = vmatprep.subr.mxu0 0.0
    %428 = vmatpush2.msra.mxu0 %v348
    %429 = vmatprep.subr.mxu0 0.0
    %430 = vmatpush2.msra.mxu0 %v347
    %431 = vmatprep.subr.mxu0 0.0
    %432 = vmatpush2.msra.mxu0 %v346
    %433 = vmatprep.mubr.f32.mxu0 %v329
    %434 = vmatmul.mubr.f32.gmra.mxu0 %v328
    %v435 = vpop.f32.mrf.mxu0
    %v436 = vadd.f32 %v367, %v435
    %v437 = vpop.f32.mrf.mxu0
    %438 = vdwg.mxu0
    %v439 = vsub.f32 0.0, %v436
    %v440 = vmul.f32 %v439, 1.442695
    %v441 = vpow.pop %v440
    %v442 = vadd.f32 %v441, 1.0
    %v443 = vrcp.pop %v442
    %v444 = vmul.f32 %v436, %v443
    %v445 = vld [vmem:[%s7] sm:$0xff]
    %v446 = vld [vmem:[%s7 + $0x8] sm:$0xff]
    %v447 = vld [vmem:[%s7 + $0x10] sm:$0xff]
    %v448 = vld [vmem:[%s7 + $0x18] sm:$0xff]
    %v449 = vld [vmem:[%s7 + $0x20] sm:$0xff]
    %v450 = vld [vmem:[%s7 + $0x28] sm:$0xff]
    %v451 = vld [vmem:[%s7 + $0x30] sm:$0xff]
    %v452 = vld [vmem:[%s7 + $0x38] sm:$0xff]
    %v453 = vld [vmem:[%s7 + $0x40] sm:$0xff]
    %v454 = vld [vmem:[%s7 + $0x48] sm:$0xff]
    %v455 = vld [vmem:[%s7 + $0x50] sm:$0xff]
    %v456 = vld [vmem:[%s7 + $0x58] sm:$0xff]
    %v457 = vld [vmem:[%s7 + $0x60] sm:$0xff]
    %v458 = vld [vmem:[%s7 + $0x68] sm:$0xff]
    %v459 = vld [vmem:[%s7 + $0x70] sm:$0xff]
    %v460 = vld [vmem:[%s7 + $0x78] sm:$0xff]
    %v461 = vld [vmem:[%s8] sm:$0x1]
    %v463 = vlaneseq
    %v464 = vshrl.u32 %v463, 7
    %v465 = vsub.s32 0, %v464
    %v466 = vrot.slane %v461, %v465
    %468 = vmatprep.subr.mxu0 0.0
    %469 = vmatpush1.msra.mxu0 %v460
    %470 = vmatprep.subr.mxu0 0.0
    %471 = vmatpush1.msra.mxu0 %v459
    %472 = vmatprep.subr.mxu0 0.0
    %473 = vmatpush1.msra.mxu0 %v458
    %474 = vmatprep.subr.mxu0 0.0
    %475 = vmatpush1.msra.mxu0 %v457
    %476 = vmatprep.subr.mxu0 0.0
    %477 = vmatpush1.msra.mxu0 %v456
    %478 = vmatprep.subr.mxu0 0.0
    %479 = vmatpush1.msra.mxu0 %v455
    %480 = vmatprep.subr.mxu0 0.0
    %481 = vmatpush1.msra.mxu0 %v454
    %482 = vmatprep.subr.mxu0 0.0
    %483 = vmatpush1.msra.mxu0 %v453
    %484 = vmatprep.subr.mxu0 0.0
    %485 = vmatpush1.msra.mxu0 %v452
    %486 = vmatprep.subr.mxu0 0.0
    %487 = vmatpush1.msra.mxu0 %v451
    %488 = vmatprep.subr.mxu0 0.0
    %489 = vmatpush1.msra.mxu0 %v450
    %490 = vmatprep.subr.mxu0 0.0
    %491 = vmatpush1.msra.mxu0 %v449
    %492 = vmatprep.subr.mxu0 0.0
    %493 = vmatpush1.msra.mxu0 %v448
    %494 = vmatprep.subr.mxu0 0.0
    %495 = vmatpush1.msra.mxu0 %v447
    %496 = vmatprep.subr.mxu0 0.0
    %497 = vmatpush1.msra.mxu0 %v446
    %498 = vmatprep.subr.mxu0 0.0
    %499 = vmatpush1.msra.mxu0 %v445
    %500 = vmatprep.subr.mxu0 0.0
    %501 = vmatpush2.msra.mxu0 0.0
    %502 = vmatprep.subr.mxu0 0.0
    %503 = vmatpush2.msra.mxu0 0.0
    %504 = vmatprep.subr.mxu0 0.0
    %505 = vmatpush2.msra.mxu0 0.0
    %506 = vmatprep.subr.mxu0 0.0
    %507 = vmatpush2.msra.mxu0 0.0
    %508 = vmatprep.subr.mxu0 0.0
    %509 = vmatpush2.msra.mxu0 0.0
    %510 = vmatprep.subr.mxu0 0.0
    %511 = vmatpush2.msra.mxu0 0.0
    %512 = vmatprep.subr.mxu0 0.0
    %513 = vmatpush2.msra.mxu0 0.0
    %514 = vmatprep.subr.mxu0 0.0
    %515 = vmatpush2.msra.mxu0 0.0
    %516 = vmatprep.subr.mxu0 0.0
    %517 = vmatpush2.msra.mxu0 0.0
    %518 = vmatprep.subr.mxu0 0.0
    %519 = vmatpush2.msra.mxu0 0.0
    %520 = vmatprep.subr.mxu0 0.0
    %521 = vmatpush2.msra.mxu0 0.0
    %522 = vmatprep.subr.mxu0 0.0
    %523 = vmatpush2.msra.mxu0 0.0
    %524 = vmatprep.subr.mxu0 0.0
    %525 = vmatpush2.msra.mxu0 0.0
    %526 = vmatprep.subr.mxu0 0.0
    %527 = vmatpush2.msra.mxu0 0.0
    %528 = vmatprep.subr.mxu0 0.0
    %529 = vmatpush2.msra.mxu0 0.0
    %530 = vmatprep.subr.mxu0 0.0
    %531 = vmatpush2.msra.mxu0 0.0
    %532 = vmatprep.mubr.f32.mxu0 0.0
    %533 = vmatmul.mubr.f32.gmra.mxu0 %v444
    %v534 = vpop.f32.mrf.mxu0
    %v535 = vadd.f32 %v466, %v534
    %v536 = vpop.f32.mrf.mxu0
    %537 = vdwg.mxu0
    %vm538 = vcmask 64512
    %539 = vst.msk [vmem:[%s9] sm:$0xff] %vm538, %v535
    // Predicated region
    $region46: #{mouse_net_forward.1} parent=1 // pred_check
      _
    $region47: #{mouse_net_forward.1} parent=1 // pred_check_branch
      %541 = sbr.rel (0) target = $region49
    $region48: #{mouse_net_forward.1} parent=1 // pred_region
      _
    $region49: #{mouse_net_forward.1} parent=1 // pred_fallthru
      _
    // Predicated region
    $region50: #{mouse_net_forward.1} parent=1 // pred_check
      _
    $region51: #{mouse_net_forward.1} parent=1 // pred_check_branch
      %543 = sbr.rel (0) target = $region53
    $region52: #{mouse_net_forward.1} parent=1 // pred_region
      _
    $region53: #{mouse_net_forward.1} parent=1 // pred_fallthru
      _
    %544 = vsyncpa [#allocation3], 1
    %545 = vsyncpa [#allocation5], 1

</llo_original>
